<compile_context>
chip_gen: v7x
topology: tpu7x:2x2x1
jax: 0.10.0
libtpu: 0.0.40
codegen_flags: <defaults>
</compile_context>

<pallas_src>
import functools
import re

import jax
import jax.numpy as jnp
from jax.experimental import pallas as pl
from jax.experimental.pallas import tpu as pltpu

_WIDTHS = (4096, 2048, 1024, 512, 256, 128)   # candidate lane-dense last dims
_SMALL_BYTES = 64 * 1024                       # below this, plain XLA wins


# ----------------------------------------------------------------------------
# Kernels
# ----------------------------------------------------------------------------
def _unary_kernel(x_ref, o_ref, *, unary, compute_dtype):
    # Leaf: o = unary(x).
    o_ref[...] = unary(x_ref[...].astype(compute_dtype)).astype(o_ref.dtype)


def _unary_affine_kernel(a_ref, b_ref, x_ref, o_ref, *, unary, compute_dtype):
    # Non-leaf: o = a * unary(x) + b, with scalar a, b held in SMEM.
    a = a_ref[0]
    b = b_ref[0]
    y = unary(x_ref[...].astype(compute_dtype))
    o_ref[...] = (a * y + b).astype(o_ref.dtype)


# ----------------------------------------------------------------------------
# Hardware / tiling helpers
# ----------------------------------------------------------------------------
@functools.lru_cache(maxsize=1)
def _hw_config():
    """(generation, tensorcores_per_chip, target_block_bytes)."""
    gen = 0
    try:
        kind = jax.devices()[0].device_kind.lower()
        m = re.search(r"(\d+)", kind)
        if m:
            gen = int(m.group(1))
    except Exception:
        gen = 0
    if gen >= 7:
        # 2 TCs/chip, 3.2 TB/s HBM -> bigger blocks to amortize step overhead.
        return gen, 2, 8 * 1024 * 1024
    return gen, 1, 4 * 1024 * 1024


def _round_up(x, m):
    return ((x + m - 1) // m) * m


def _choose_width(n):
    """Widest lane-dense last dim dividing n, or None if n % 128 != 0."""
    for w in _WIDTHS:
        if n % w == 0:
            return w
    return None


# ----------------------------------------------------------------------------
# Module factory
# ----------------------------------------------------------------------------
def make_unary_operation(operator, is_leave):
    """Returns (params, apply_fn) mirroring the PyTorch module."""
    if is_leave:
        params = {}
    else:
        # nn.Parameter(torch.Tensor(1)); a.fill_(1), b.fill_(0)
        params = {
            "a": jnp.ones((1,), dtype=jnp.float32),
            "b": jnp.zeros((1,), dtype=jnp.float32),
        }

    def _jnp_fallback(params, x):
        # Plain XLA elementwise path (already at 1R+1W roofline, fuses freely).
        if is_leave:
            return operator(x)
        return (params["a"] * operator(x) + params["b"]).astype(x.dtype)

    def apply_fn(params, x):
        orig_shape = x.shape
        orig_dtype = x.dtype
        n = x.size
        if n == 0:
            return x

        itemsize = jnp.dtype(orig_dtype).itemsize
        total_bytes = n * itemsize

        # Tiny tensors: pallas_call launch/grid overhead dominates.
        if total_bytes < _SMALL_BYTES:
            return _jnp_fallback(params, x)

        width = _choose_width(n)
        if width is None:
            # Ragged element count: XLA is already at roofline; avoiding it
            # would cost extra full-tensor HBM copies (pad/slice or concat).
            return _jnp_fallback(params, x)

        gen, num_tc, target_block_bytes = _hw_config()

        # Sub-32-bit dtypes pack along sublanes; keep packed vregs full.
        sublanes = 8 * max(1, 4 // itemsize)

        rows = n // width
        x2d = jnp.ravel(x).reshape(rows, width)   # free reshape, no padding

        # Block rows: big enough to amortize the ~0.35 us per-grid-step cost.
        target_rows = max(
            sublanes,
            (target_block_bytes // (width * itemsize)) // sublanes * sublanes,
        )
        # On v7x (2 TCs) aim for >= 4 steps for arrays > ~2 MiB so each core
        # gets >= 2 steps and can still double-buffer.
        if num_tc >= 2 and total_bytes > 2 * 1024 * 1024:
            target_rows = min(target_rows, _round_up(pl.cdiv(rows, 4), sublanes))
        tile_rows = min(target_rows, rows)
        # tile_rows < rows => multiple of `sublanes` (valid (8,128) block);
        # tile_rows == rows => full-array block (always valid).

        grid = (pl.cdiv(rows, tile_rows),)        # last block masked if ragged

        block_bytes = tile_rows * width * itemsize
        # ~2 in-bufs + 2 out-bufs double-buffered, plus slack; floor 16 MiB.
        vmem_limit = min(max(5 * block_bytes, 16 * 1024 * 1024), 48 * 1024 * 1024)

        # bf16 compute is native on v6e/v7x VPU/EUP; v5e needs the f32 up-cast.
        if orig_dtype == jnp.float32:
            compute_dtype = jnp.float32
        elif orig_dtype == jnp.bfloat16 and gen >= 6:
            compute_dtype = jnp.bfloat16
        else:
            compute_dtype = jnp.float32

        block_spec = pl.BlockSpec((tile_rows, width), lambda i: (i, 0))
        compiler_params = pltpu.CompilerParams(
            dimension_semantics=("parallel",),
            vmem_limit_bytes=vmem_limit,
        )
        out_shape = jax.ShapeDtypeStruct((rows, width), orig_dtype)

        if is_leave:
            out2d = pl.pallas_call(
                functools.partial(
                    _unary_kernel, unary=operator, compute_dtype=compute_dtype
                ),
                out_shape=out_shape,
                grid=grid,
                in_specs=[block_spec],
                out_specs=block_spec,
                compiler_params=compiler_params,
                input_output_aliases={0: 0},   # out may reuse x's HBM buffer
            )(x2d)
        else:
            a = params["a"].astype(jnp.float32)
            b = params["b"].astype(jnp.float32)
            out2d = pl.pallas_call(
                functools.partial(
                    _unary_affine_kernel, unary=operator, compute_dtype=compute_dtype
                ),
                out_shape=out_shape,
                grid=grid,
                in_specs=[
                    pl.BlockSpec(memory_space=pltpu.MemorySpace.SMEM),  # a
                    pl.BlockSpec(memory_space=pltpu.MemorySpace.SMEM),  # b
                    block_spec,
                ],
                out_specs=block_spec,
                compiler_params=compiler_params,
                input_output_aliases={2: 0},   # out may reuse x's HBM buffer
            )(a, b, x2d)

        return out2d.reshape(orig_shape)

    return params, apply_fn


if __name__ == "__main__":
    # Small NCHW input consistent with an elementwise unary op (fast path).
    key = jax.random.PRNGKey(0)
    x = jax.random.normal(key, (2, 4, 16, 16), dtype=jnp.float32)

    # Non-leaf node: a * tanh(x) + b, with a=1, b=0 as initialized.
    params, apply_fn = make_unary_operation(jnp.tanh, is_leave=False)
    out = jax.block_until_ready(apply_fn(params, x))
    ref = params["a"] * jnp.tanh(x) + params["b"]
    assert out.shape == x.shape and out.dtype == x.dtype
    assert jnp.allclose(out, ref, atol=1e-5), "small-input mismatch"

    # Larger aligned input -> exercises the Pallas kernel path.
    x_big = jax.random.normal(jax.random.PRNGKey(1), (8, 4, 64, 64), dtype=jnp.float32)
    out_big = jax.block_until_ready(apply_fn(params, x_big))
    assert out_big.shape == x_big.shape and out_big.dtype == x_big.dtype
    assert jnp.allclose(out_big, jnp.tanh(x_big), atol=1e-5), "pallas affine mismatch"

    # Leaf node via the Pallas path: just unary(x).
    params_leaf, apply_leaf = make_unary_operation(jnp.sin, is_leave=True)
    out_leaf = jax.block_until_ready(apply_leaf(params_leaf, x_big))
    assert jnp.allclose(out_leaf, jnp.sin(x_big), atol=1e-5), "pallas leaf mismatch"

    # Ragged element count (not a multiple of 128) -> roofline XLA fallback.
    x_ragged = jax.random.normal(
        jax.random.PRNGKey(2), (3, 5, 37, 41), dtype=jnp.float32
    )
    out_r = jax.block_until_ready(apply_fn(params, x_ragged))
    assert jnp.allclose(out_r, jnp.tanh(x_ragged), atol=1e-5), "ragged mismatch"

    print("KERNEL_OK")
</pallas_src>

<mosaic_0001>
module attributes {stable_mosaic.version = 11 : i64} {
  func.func @_unary_affine_kernel(%arg0: i32, %arg1: memref<1xf32, #tpu.memory_space<smem>>, %arg2: memref<1xf32, #tpu.memory_space<smem>>, %arg3: memref<32x4096xf32, #tpu.memory_space<vmem>>, %arg4: memref<32x4096xf32, #tpu.memory_space<vmem>>) attributes {dimension_semantics = [#tpu.dimension_semantics<parallel>], iteration_bounds = array<i64: 1>, scalar_prefetch = 0 : i64, scratch_operands = 0 : i64, tpu.core_type = #tpu.core_type<tc>, window_params = [{transform_indices = @transform_0, window_bounds = array<i64: 1>}, {transform_indices = @transform_1, window_bounds = array<i64: 1>}, {transform_indices = @transform_2, window_bounds = array<i64: 32, 4096>}, {transform_indices = @transform_3, window_bounds = array<i64: 32, 4096>}]} {
    %c0 = arith.constant 0 : index
    %0 = memref.load %arg1[%c0] : memref<1xf32, #tpu.memory_space<smem>>
    %c0_0 = arith.constant 0 : index
    %1 = memref.load %arg2[%c0_0] : memref<1xf32, #tpu.memory_space<smem>>
    %c0_1 = arith.constant 0 : index
    %c0_2 = arith.constant 0 : index
    %2 = vector.load %arg3[%c0_1, %c0_2] : memref<32x4096xf32, #tpu.memory_space<vmem>>, vector<32x4096xf32>
    %3 = math.tanh %2 : vector<32x4096xf32>
    %4 = vector.broadcast %0 : f32 to vector<32x4096xf32>
    %5 = arith.mulf %4, %3 : vector<32x4096xf32>
    %6 = vector.broadcast %1 : f32 to vector<32x4096xf32>
    %7 = arith.addf %5, %6 : vector<32x4096xf32>
    %c0_3 = arith.constant 0 : index
    %c0_4 = arith.constant 0 : index
    %8 = vector.load %arg4[%c0_3, %c0_4] : memref<32x4096xf32, #tpu.memory_space<vmem>>, vector<32x4096xf32>
    tpu.vector_store %arg4[%c0_3, %c0_4], %7 {strides = array<i32>} : memref<32x4096xf32, #tpu.memory_space<vmem>>, vector<32x4096xf32>,
    return
  }
  func.func @transform_0(%arg0: i32) -> i32 {
    %c0_i32 = arith.constant 0 : i32
    %c0_i32_0 = arith.constant 0 : i32
    return %c0_i32 : i32
  }
  func.func @transform_1(%arg0: i32) -> i32 {
    %c0_i32 = arith.constant 0 : i32
    %c0_i32_0 = arith.constant 0 : i32
    return %c0_i32 : i32
  }
  func.func @transform_2(%arg0: i32) -> (i32, i32) {
    %c0_i32 = arith.constant 0 : i32
    %c0_i32_0 = arith.constant 0 : i32
    return %arg0, %c0_i32 : i32, i32
  }
  func.func @transform_3(%arg0: i32) -> (i32, i32) {
    %c0_i32 = arith.constant 0 : i32
    %c0_i32_0 = arith.constant 0 : i32
    return %arg0, %c0_i32 : i32, i32
  }
}

</mosaic_0001>

<llo_original>
// kernel: tpu_custom_call.1
$region0: #{tpu_custom_call.1}
  #allocation0 [shape = 'u32[]', space=smem, size = 0x4, offset = 0x4, fixed_abs, tag = 'smem constant byte address 0x4 - core index']
  #allocation1 [shape = 'u32[144,128]{1,0:T(1,128)}', space=vmem, size = 0x12000, scoped, tag = 'internal scratch']
  #allocation2 [shape = 'f32[1]{0:T(128)S(6)}', space=smem, size = 0x200, scoped, tag = 'scoped memory for tpu_custom_call.1']
  #allocation3 [shape = 'f32[1]{0:T(128)S(6)}', space=smem, size = 0x200, scoped, tag = 'scoped memory for tpu_custom_call.1']
  %s0 = inlined_call_operand.<no memory space> [shape: f32[1], index: 0, kind: input, shape index: {}]
  %s1 = inlined_call_operand.<no memory space> [shape: f32[1], index: 1, kind: input, shape index: {}]
  %s2 = inlined_call_operand.hbm [shape: f32[32,4096], index: 2, kind: input, shape index: {}, may-alias: {2,3}]
  %s3 = inlined_call_operand.hbm [shape: f32[32,4096], index: 3, kind: output, shape index: {}, may-alias: {2,3}]
  %s4 = sld [smem:[#allocation0]]
  $region26: #{tpu_custom_call.1} parent=0
    _
  %s6 = ssub.s32 1, %s4
  %s7 = scalar_select 0, %s6, %s4
  %8 = sst [smem:[#allocation2]] %s0
  %9 = sst [smem:[#allocation3]] %s1
  $region1: #{tpu_custom_call.1} parent=0
    #allocation4 [shape = 'u8[524288]{0}', space=vmem, size = 0x80000, scoped, tag = 'input window, operand 2, single buffered']
    #allocation5 [shape = 's32[1]{0}', space=sflag, size = 0x4, scoped, tag = 'scoped memory for tpu_custom_call.1']
    #allocation6 [shape = 's32[1]{0}', space=sflag, size = 0x4, scoped, tag = 'scoped memory for tpu_custom_call.1']
    #allocation7 [shape = 'u8[524288]{0}', space=vmem, size = 0x80000, scoped, tag = 'output window, operand 0, single buffered']
    %10 = vsyncpa [#allocation5], 0
    %11 = vsyncpa [#allocation6], 0
    // Predicated region
    $region2: #{tpu_custom_call.1} parent=1 // pred_check
      _
    $region3: #{tpu_custom_call.1} parent=1 // pred_check_branch
      %13 = sbr.rel (0) target = $region5
    $region4: #{tpu_custom_call.1} parent=1 // pred_region
      _
    $region5: #{tpu_custom_call.1} parent=1 // pred_fallthru
      _
    // Predicated region
    $region6: #{tpu_custom_call.1} parent=1 // pred_check
      _
    $region7: #{tpu_custom_call.1} parent=1 // pred_check_branch
      %15 = sbr.rel (0) target = $region9
    $region8: #{tpu_custom_call.1} parent=1 // pred_region
      _
    $region9: #{tpu_custom_call.1} parent=1 // pred_fallthru
      _
    // Predicated region
    $region10: #{tpu_custom_call.1} parent=1 // pred_check
      _
    $region11: #{tpu_custom_call.1} parent=1 // pred_check_branch
      %17 = sbr.rel (0) target = $region13
    $region12: #{tpu_custom_call.1} parent=1 // pred_region
      %s19 = ssub.s32 16384, 16384
      %20 = vsyncadd [#allocation5], %s19
      %s21 = sshll.u32 [#allocation4], 4
      %s22 = int_to_ptr.vmem [resolvable:$true] %s21
      %27 = dma.hbm_to_vmem [thread:$0]  %s2, 16384, %s22, [#allocation5], 4096, 4096, 256
    $region13: #{tpu_custom_call.1} parent=1 // pred_fallthru
      _
    // Predicated region
    $region14: #{tpu_custom_call.1} parent=1 // pred_check
      _
    $region15: #{tpu_custom_call.1} parent=1 // pred_check_branch
      %29 = sbr.rel (0) target = $region17
    $region16: #{tpu_custom_call.1} parent=1 // pred_region
      %30 = dma.done [#allocation5], 16384
    $region17: #{tpu_custom_call.1} parent=1 // pred_fallthru
      _
    %s31 = sld [smem:[#allocation2]]
    %s32 = sld [smem:[#allocation3]]
    %v33 = vld [vmem:[#allocation4] sm:$0xff]
    %v34 = vld [vmem:[#allocation4 + $0x8] sm:$0xff]
    %v35 = vld [vmem:[#allocation4 + $0x10] sm:$0xff]
    %v36 = vld [vmem:[#allocation4 + $0x18] sm:$0xff]
    %v37 = vld [vmem:[#allocation4 + $0x20] sm:$0xff]
    %v38 = vld [vmem:[#allocation4 + $0x28] sm:$0xff]
    %v39 = vld [vmem:[#allocation4 + $0x30] sm:$0xff]
    %v40 = vld [vmem:[#allocation4 + $0x38] sm:$0xff]
    %v41 = vld [vmem:[#allocation4 + $0x40] sm:$0xff]
    %v42 = vld [vmem:[#allocation4 + $0x48] sm:$0xff]
    %v43 = vld [vmem:[#allocation4 + $0x50] sm:$0xff]
    %v44 = vld [vmem:[#allocation4 + $0x58] sm:$0xff]
    %v45 = vld [vmem:[#allocation4 + $0x60] sm:$0xff]
    %v46 = vld [vmem:[#allocation4 + $0x68] sm:$0xff]
    %v47 = vld [vmem:[#allocation4 + $0x70] sm:$0xff]
    %v48 = vld [vmem:[#allocation4 + $0x78] sm:$0xff]
    %v49 = vld [vmem:[#allocation4 + $0x80] sm:$0xff]
    %v50 = vld [vmem:[#allocation4 + $0x88] sm:$0xff]
    %v51 = vld [vmem:[#allocation4 + $0x90] sm:$0xff]
    %v52 = vld [vmem:[#allocation4 + $0x98] sm:$0xff]
    %v53 = vld [vmem:[#allocation4 + $0xa0] sm:$0xff]
    %v54 = vld [vmem:[#allocation4 + $0xa8] sm:$0xff]
    %v55 = vld [vmem:[#allocation4 + $0xb0] sm:$0xff]
    %v56 = vld [vmem:[#allocation4 + $0xb8] sm:$0xff]
    %v57 = vld [vmem:[#allocation4 + $0xc0] sm:$0xff]
    %v58 = vld [vmem:[#allocation4 + $0xc8] sm:$0xff]
    %v59 = vld [vmem:[#allocation4 + $0xd0] sm:$0xff]
    %v60 = vld [vmem:[#allocation4 + $0xd8] sm:$0xff]
    %v61 = vld [vmem:[#allocation4 + $0xe0] sm:$0xff]
    %v62 = vld [vmem:[#allocation4 + $0xe8] sm:$0xff]
    %v63 = vld [vmem:[#allocation4 + $0xf0] sm:$0xff]
    %v64 = vld [vmem:[#allocation4 + $0xf8] sm:$0xff]
    %v65 = vld [vmem:[#allocation4 + $0x100] sm:$0xff]
    %v66 = vld [vmem:[#allocation4 + $0x108] sm:$0xff]
    %v67 = vld [vmem:[#allocation4 + $0x110] sm:$0xff]
    %v68 = vld [vmem:[#allocation4 + $0x118] sm:$0xff]
    %v69 = vld [vmem:[#allocation4 + $0x120] sm:$0xff]
    %v70 = vld [vmem:[#allocation4 + $0x128] sm:$0xff]
    %v71 = vld [vmem:[#allocation4 + $0x130] sm:$0xff]
    %v72 = vld [vmem:[#allocation4 + $0x138] sm:$0xff]
    %v73 = vld [vmem:[#allocation4 + $0x140] sm:$0xff]
    %v74 = vld [vmem:[#allocation4 + $0x148] sm:$0xff]
    %v75 = vld [vmem:[#allocation4 + $0x150] sm:$0xff]
    %v76 = vld [vmem:[#allocation4 + $0x158] sm:$0xff]
    %v77 = vld [vmem:[#allocation4 + $0x160] sm:$0xff]
    %v78 = vld [vmem:[#allocation4 + $0x168] sm:$0xff]
    %v79 = vld [vmem:[#allocation4 + $0x170] sm:$0xff]
    %v80 = vld [vmem:[#allocation4 + $0x178] sm:$0xff]
    %v81 = vld [vmem:[#allocation4 + $0x180] sm:$0xff]
    %v82 = vld [vmem:[#allocation4 + $0x188] sm:$0xff]
    %v83 = vld [vmem:[#allocation4 + $0x190] sm:$0xff]
    %v84 = vld [vmem:[#allocation4 + $0x198] sm:$0xff]
    %v85 = vld [vmem:[#allocation4 + $0x1a0] sm:$0xff]
    %v86 = vld [vmem:[#allocation4 + $0x1a8] sm:$0xff]
    %v87 = vld [vmem:[#allocation4 + $0x1b0] sm:$0xff]
    %v88 = vld [vmem:[#allocation4 + $0x1b8] sm:$0xff]
    %v89 = vld [vmem:[#allocation4 + $0x1c0] sm:$0xff]
    %v90 = vld [vmem:[#allocation4 + $0x1c8] sm:$0xff]
    %v91 = vld [vmem:[#allocation4 + $0x1d0] sm:$0xff]
    %v92 = vld [vmem:[#allocation4 + $0x1d8] sm:$0xff]
    %v93 = vld [vmem:[#allocation4 + $0x1e0] sm:$0xff]
    %v94 = vld [vmem:[#allocation4 + $0x1e8] sm:$0xff]
    %v95 = vld [vmem:[#allocation4 + $0x1f0] sm:$0xff]
    %v96 = vld [vmem:[#allocation4 + $0x1f8] sm:$0xff]
    %v97 = vld [vmem:[#allocation4 + $0x200] sm:$0xff]
    %v98 = vld [vmem:[#allocation4 + $0x208] sm:$0xff]
    %v99 = vld [vmem:[#allocation4 + $0x210] sm:$0xff]
    %v100 = vld [vmem:[#allocation4 + $0x218] sm:$0xff]
    %v101 = vld [vmem:[#allocation4 + $0x220] sm:$0xff]
    %v102 = vld [vmem:[#allocation4 + $0x228] sm:$0xff]
    %v103 = vld [vmem:[#allocation4 + $0x230] sm:$0xff]
    %v104 = vld [vmem:[#allocation4 + $0x238] sm:$0xff]
    %v105 = vld [vmem:[#allocation4 + $0x240] sm:$0xff]
    %v106 = vld [vmem:[#allocation4 + $0x248] sm:$0xff]
    %v107 = vld [vmem:[#allocation4 + $0x250] sm:$0xff]
    %v108 = vld [vmem:[#allocation4 + $0x258] sm:$0xff]
    %v109 = vld [vmem:[#allocation4 + $0x260] sm:$0xff]
    %v110 = vld [vmem:[#allocation4 + $0x268] sm:$0xff]
    %v111 = vld [vmem:[#allocation4 + $0x270] sm:$0xff]
    %v112 = vld [vmem:[#allocation4 + $0x278] sm:$0xff]
    %v113 = vld [vmem:[#allocation4 + $0x280] sm:$0xff]
    %v114 = vld [vmem:[#allocation4 + $0x288] sm:$0xff]
    %v115 = vld [vmem:[#allocation4 + $0x290] sm:$0xff]
    %v116 = vld [vmem:[#allocation4 + $0x298] sm:$0xff]
    %v117 = vld [vmem:[#allocation4 + $0x2a0] sm:$0xff]
    %v118 = vld [vmem:[#allocation4 + $0x2a8] sm:$0xff]
    %v119 = vld [vmem:[#allocation4 + $0x2b0] sm:$0xff]
    %v120 = vld [vmem:[#allocation4 + $0x2b8] sm:$0xff]
    %v121 = vld [vmem:[#allocation4 + $0x2c0] sm:$0xff]
    %v122 = vld [vmem:[#allocation4 + $0x2c8] sm:$0xff]
    %v123 = vld [vmem:[#allocation4 + $0x2d0] sm:$0xff]
    %v124 = vld [vmem:[#allocation4 + $0x2d8] sm:$0xff]
    %v125 = vld [vmem:[#allocation4 + $0x2e0] sm:$0xff]
    %v126 = vld [vmem:[#allocation4 + $0x2e8] sm:$0xff]
    %v127 = vld [vmem:[#allocation4 + $0x2f0] sm:$0xff]
    %v128 = vld [vmem:[#allocation4 + $0x2f8] sm:$0xff]
    %v129 = vld [vmem:[#allocation4 + $0x300] sm:$0xff]
    %v130 = vld [vmem:[#allocation4 + $0x308] sm:$0xff]
    %v131 = vld [vmem:[#allocation4 + $0x310] sm:$0xff]
    %v132 = vld [vmem:[#allocation4 + $0x318] sm:$0xff]
    %v133 = vld [vmem:[#allocation4 + $0x320] sm:$0xff]
    %v134 = vld [vmem:[#allocation4 + $0x328] sm:$0xff]
    %v135 = vld [vmem:[#allocation4 + $0x330] sm:$0xff]
    %v136 = vld [vmem:[#allocation4 + $0x338] sm:$0xff]
    %v137 = vld [vmem:[#allocation4 + $0x340] sm:$0xff]
    %v138 = vld [vmem:[#allocation4 + $0x348] sm:$0xff]
    %v139 = vld [vmem:[#allocation4 + $0x350] sm:$0xff]
    %v140 = vld [vmem:[#allocation4 + $0x358] sm:$0xff]
    %v141 = vld [vmem:[#allocation4 + $0x360] sm:$0xff]
    %v142 = vld [vmem:[#allocation4 + $0x368] sm:$0xff]
    %v143 = vld [vmem:[#allocation4 + $0x370] sm:$0xff]
    %v144 = vld [vmem:[#allocation4 + $0x378] sm:$0xff]
    %v145 = vld [vmem:[#allocation4 + $0x380] sm:$0xff]
    %v146 = vld [vmem:[#allocation4 + $0x388] sm:$0xff]
    %v147 = vld [vmem:[#allocation4 + $0x390] sm:$0xff]
    %v148 = vld [vmem:[#allocation4 + $0x398] sm:$0xff]
    %v149 = vld [vmem:[#allocation4 + $0x3a0] sm:$0xff]
    %v150 = vld [vmem:[#allocation4 + $0x3a8] sm:$0xff]
    %v151 = vld [vmem:[#allocation4 + $0x3b0] sm:$0xff]
    %v152 = vld [vmem:[#allocation4 + $0x3b8] sm:$0xff]
    %v153 = vld [vmem:[#allocation4 + $0x3c0] sm:$0xff]
    %v154 = vld [vmem:[#allocation4 + $0x3c8] sm:$0xff]
    %v155 = vld [vmem:[#allocation4 + $0x3d0] sm:$0xff]
    %v156 = vld [vmem:[#allocation4 + $0x3d8] sm:$0xff]
    %v157 = vld [vmem:[#allocation4 + $0x3e0] sm:$0xff]
    %v158 = vld [vmem:[#allocation4 + $0x3e8] sm:$0xff]
    %v159 = vld [vmem:[#allocation4 + $0x3f0] sm:$0xff]
    %v160 = vld [vmem:[#allocation4 + $0x3f8] sm:$0xff]
    %v161 = vtanh.pop %v33
    %v162 = vtanh.pop %v34
    %v163 = vtanh.pop %v35
    %v164 = vtanh.pop %v36
    %v165 = vtanh.pop %v37
    %v166 = vtanh.pop %v38
    %v167 = vtanh.pop %v39
    %v168 = vtanh.pop %v40
    %v169 = vtanh.pop %v41
    %v170 = vtanh.pop %v42
    %v171 = vtanh.pop %v43
    %v172 = vtanh.pop %v44
    %v173 = vtanh.pop %v45
    %v174 = vtanh.pop %v46
    %v175 = vtanh.pop %v47
    %v176 = vtanh.pop %v48
    %v177 = vtanh.pop %v49
    %v178 = vtanh.pop %v50
    %v179 = vtanh.pop %v51
    %v180 = vtanh.pop %v52
    %v181 = vtanh.pop %v53
    %v182 = vtanh.pop %v54
    %v183 = vtanh.pop %v55
    %v184 = vtanh.pop %v56
    %v185 = vtanh.pop %v57
    %v186 = vtanh.pop %v58
    %v187 = vtanh.pop %v59
    %v188 = vtanh.pop %v60
    %v189 = vtanh.pop %v61
    %v190 = vtanh.pop %v62
    %v191 = vtanh.pop %v63
    %v192 = vtanh.pop %v64
    %v193 = vtanh.pop %v65
    %v194 = vtanh.pop %v66
    %v195 = vtanh.pop %v67
    %v196 = vtanh.pop %v68
    %v197 = vtanh.pop %v69
    %v198 = vtanh.pop %v70
    %v199 = vtanh.pop %v71
    %v200 = vtanh.pop %v72
    %v201 = vtanh.pop %v73
    %v202 = vtanh.pop %v74
    %v203 = vtanh.pop %v75
    %v204 = vtanh.pop %v76
    %v205 = vtanh.pop %v77
    %v206 = vtanh.pop %v78
    %v207 = vtanh.pop %v79
    %v208 = vtanh.pop %v80
    %v209 = vtanh.pop %v81
    %v210 = vtanh.pop %v82
    %v211 = vtanh.pop %v83
    %v212 = vtanh.pop %v84
    %v213 = vtanh.pop %v85
    %v214 = vtanh.pop %v86
    %v215 = vtanh.pop %v87
    %v216 = vtanh.pop %v88
    %v217 = vtanh.pop %v89
    %v218 = vtanh.pop %v90
    %v219 = vtanh.pop %v91
    %v220 = vtanh.pop %v92
    %v221 = vtanh.pop %v93
    %v222 = vtanh.pop %v94
    %v223 = vtanh.pop %v95
    %v224 = vtanh.pop %v96
    %v225 = vtanh.pop %v97
    %v226 = vtanh.pop %v98
    %v227 = vtanh.pop %v99
    %v228 = vtanh.pop %v100
    %v229 = vtanh.pop %v101
    %v230 = vtanh.pop %v102
    %v231 = vtanh.pop %v103
    %v232 = vtanh.pop %v104
    %v233 = vtanh.pop %v105
    %v234 = vtanh.pop %v106
    %v235 = vtanh.pop %v107
    %v236 = vtanh.pop %v108
    %v237 = vtanh.pop %v109
    %v238 = vtanh.pop %v110
    %v239 = vtanh.pop %v111
    %v240 = vtanh.pop %v112
    %v241 = vtanh.pop %v113
    %v242 = vtanh.pop %v114
    %v243 = vtanh.pop %v115
    %v244 = vtanh.pop %v116
    %v245 = vtanh.pop %v117
    %v246 = vtanh.pop %v118
    %v247 = vtanh.pop %v119
    %v248 = vtanh.pop %v120
    %v249 = vtanh.pop %v121
    %v250 = vtanh.pop %v122
    %v251 = vtanh.pop %v123
    %v252 = vtanh.pop %v124
    %v253 = vtanh.pop %v125
    %v254 = vtanh.pop %v126
    %v255 = vtanh.pop %v127
    %v256 = vtanh.pop %v128
    %v257 = vtanh.pop %v129
    %v258 = vtanh.pop %v130
    %v259 = vtanh.pop %v131
    %v260 = vtanh.pop %v132
    %v261 = vtanh.pop %v133
    %v262 = vtanh.pop %v134
    %v263 = vtanh.pop %v135
    %v264 = vtanh.pop %v136
    %v265 = vtanh.pop %v137
    %v266 = vtanh.pop %v138
    %v267 = vtanh.pop %v139
    %v268 = vtanh.pop %v140
    %v269 = vtanh.pop %v141
    %v270 = vtanh.pop %v142
    %v271 = vtanh.pop %v143
    %v272 = vtanh.pop %v144
    %v273 = vtanh.pop %v145
    %v274 = vtanh.pop %v146
    %v275 = vtanh.pop %v147
    %v276 = vtanh.pop %v148
    %v277 = vtanh.pop %v149
    %v278 = vtanh.pop %v150
    %v279 = vtanh.pop %v151
    %v280 = vtanh.pop %v152
    %v281 = vtanh.pop %v153
    %v282 = vtanh.pop %v154
    %v283 = vtanh.pop %v155
    %v284 = vtanh.pop %v156
    %v285 = vtanh.pop %v157
    %v286 = vtanh.pop %v158
    %v287 = vtanh.pop %v159
    %v288 = vtanh.pop %v160
    %v289 = vstv %s31
    %v290 = vmul.f32 %v289, %v161
    %v291 = vmul.f32 %v289, %v162
    %v292 = vmul.f32 %v289, %v163
    %v293 = vmul.f32 %v289, %v164
    %v294 = vmul.f32 %v289, %v165
    %v295 = vmul.f32 %v289, %v166
    %v296 = vmul.f32 %v289, %v167
    %v297 = vmul.f32 %v289, %v168
    %v298 = vmul.f32 %v289, %v169
    %v299 = vmul.f32 %v289, %v170
    %v300 = vmul.f32 %v289, %v171
    %v301 = vmul.f32 %v289, %v172
    %v302 = vmul.f32 %v289, %v173
    %v303 = vmul.f32 %v289, %v174
    %v304 = vmul.f32 %v289, %v175
    %v305 = vmul.f32 %v289, %v176
    %v306 = vmul.f32 %v289, %v177
    %v307 = vmul.f32 %v289, %v178
    %v308 = vmul.f32 %v289, %v179
    %v309 = vmul.f32 %v289, %v180
    %v310 = vmul.f32 %v289, %v181
    %v311 = vmul.f32 %v289, %v182
    %v312 = vmul.f32 %v289, %v183
    %v313 = vmul.f32 %v289, %v184
    %v314 = vmul.f32 %v289, %v185
    %v315 = vmul.f32 %v289, %v186
    %v316 = vmul.f32 %v289, %v187
    %v317 = vmul.f32 %v289, %v188
    %v318 = vmul.f32 %v289, %v189
    %v319 = vmul.f32 %v289, %v190
    %v320 = vmul.f32 %v289, %v191
    %v321 = vmul.f32 %v289, %v192
    %v322 = vmul.f32 %v289, %v193
    %v323 = vmul.f32 %v289, %v194
    %v324 = vmul.f32 %v289, %v195
    %v325 = vmul.f32 %v289, %v196
    %v326 = vmul.f32 %v289, %v197
    %v327 = vmul.f32 %v289, %v198
    %v328 = vmul.f32 %v289, %v199
    %v329 = vmul.f32 %v289, %v200
    %v330 = vmul.f32 %v289, %v201
    %v331 = vmul.f32 %v289, %v202
    %v332 = vmul.f32 %v289, %v203
    %v333 = vmul.f32 %v289, %v204
    %v334 = vmul.f32 %v289, %v205
    %v335 = vmul.f32 %v289, %v206
    %v336 = vmul.f32 %v289, %v207
    %v337 = vmul.f32 %v289, %v208
    %v338 = vmul.f32 %v289, %v209
    %v339 = vmul.f32 %v289, %v210
    %v340 = vmul.f32 %v289, %v211
    %v341 = vmul.f32 %v289, %v212
    %v342 = vmul.f32 %v289, %v213
    %v343 = vmul.f32 %v289, %v214
    %v344 = vmul.f32 %v289, %v215
    %v345 = vmul.f32 %v289, %v216
    %v346 = vmul.f32 %v289, %v217
    %v347 = vmul.f32 %v289, %v218
    %v348 = vmul.f32 %v289, %v219
    %v349 = vmul.f32 %v289, %v220
    %v350 = vmul.f32 %v289, %v221
    %v351 = vmul.f32 %v289, %v222
    %v352 = vmul.f32 %v289, %v223
    %v353 = vmul.f32 %v289, %v224
    %v354 = vmul.f32 %v289, %v225
    %v355 = vmul.f32 %v289, %v226
    %v356 = vmul.f32 %v289, %v227
    %v357 = vmul.f32 %v289, %v228
    %v358 = vmul.f32 %v289, %v229
    %v359 = vmul.f32 %v289, %v230
    %v360 = vmul.f32 %v289, %v231
    %v361 = vmul.f32 %v289, %v232
    %v362 = vmul.f32 %v289, %v233
    %v363 = vmul.f32 %v289, %v234
    %v364 = vmul.f32 %v289, %v235
    %v365 = vmul.f32 %v289, %v236
    %v366 = vmul.f32 %v289, %v237
    %v367 = vmul.f32 %v289, %v238
    %v368 = vmul.f32 %v289, %v239
    %v369 = vmul.f32 %v289, %v240
    %v370 = vmul.f32 %v289, %v241
    %v371 = vmul.f32 %v289, %v242
    %v372 = vmul.f32 %v289, %v243
    %v373 = vmul.f32 %v289, %v244
    %v374 = vmul.f32 %v289, %v245
    %v375 = vmul.f32 %v289, %v246
    %v376 = vmul.f32 %v289, %v247
    %v377 = vmul.f32 %v289, %v248
    %v378 = vmul.f32 %v289, %v249
    %v379 = vmul.f32 %v289, %v250
    %v380 = vmul.f32 %v289, %v251
    %v381 = vmul.f32 %v289, %v252
    %v382 = vmul.f32 %v289, %v253
    %v383 = vmul.f32 %v289, %v254
    %v384 = vmul.f32 %v289, %v255
    %v385 = vmul.f32 %v289, %v256
    %v386 = vmul.f32 %v289, %v257
    %v387 = vmul.f32 %v289, %v258
    %v388 = vmul.f32 %v289, %v259
    %v389 = vmul.f32 %v289, %v260
    %v390 = vmul.f32 %v289, %v261
    %v391 = vmul.f32 %v289, %v262
    %v392 = vmul.f32 %v289, %v263
    %v393 = vmul.f32 %v289, %v264
    %v394 = vmul.f32 %v289, %v265
    %v395 = vmul.f32 %v289, %v266
    %v396 = vmul.f32 %v289, %v267
    %v397 = vmul.f32 %v289, %v268
    %v398 = vmul.f32 %v289, %v269
    %v399 = vmul.f32 %v289, %v270
    %v400 = vmul.f32 %v289, %v271
    %v401 = vmul.f32 %v289, %v272
    %v402 = vmul.f32 %v289, %v273
    %v403 = vmul.f32 %v289, %v274
    %v404 = vmul.f32 %v289, %v275
    %v405 = vmul.f32 %v289, %v276
    %v406 = vmul.f32 %v289, %v277
    %v407 = vmul.f32 %v289, %v278
    %v408 = vmul.f32 %v289, %v279
    %v409 = vmul.f32 %v289, %v280
    %v410 = vmul.f32 %v289, %v281
    %v411 = vmul.f32 %v289, %v282
    %v412 = vmul.f32 %v289, %v283
    %v413 = vmul.f32 %v289, %v284
    %v414 = vmul.f32 %v289, %v285
    %v415 = vmul.f32 %v289, %v286
    %v416 = vmul.f32 %v289, %v287
    %v417 = vmul.f32 %v289, %v288
    %v418 = vstv %s32
    %v419 = vadd.f32 %v290, %v418
    %v420 = vadd.f32 %v291, %v418
    %v421 = vadd.f32 %v292, %v418
    %v422 = vadd.f32 %v293, %v418
    %v423 = vadd.f32 %v294, %v418
    %v424 = vadd.f32 %v295, %v418
    %v425 = vadd.f32 %v296, %v418
    %v426 = vadd.f32 %v297, %v418
    %v427 = vadd.f32 %v298, %v418
    %v428 = vadd.f32 %v299, %v418
    %v429 = vadd.f32 %v300, %v418
    %v430 = vadd.f32 %v301, %v418
    %v431 = vadd.f32 %v302, %v418
    %v432 = vadd.f32 %v303, %v418
    %v433 = vadd.f32 %v304, %v418
    %v434 = vadd.f32 %v305, %v418
    %v435 = vadd.f32 %v306, %v418
    %v436 = vadd.f32 %v307, %v418
    %v437 = vadd.f32 %v308, %v418
    %v438 = vadd.f32 %v309, %v418
    %v439 = vadd.f32 %v310, %v418
    %v440 = vadd.f32 %v311, %v418
    %v441 = vadd.f32 %v312, %v418
    %v442 = vadd.f32 %v313, %v418
    %v443 = vadd.f32 %v314, %v418
    %v444 = vadd.f32 %v315, %v418
    %v445 = vadd.f32 %v316, %v418
    %v446 = vadd.f32 %v317, %v418
    %v447 = vadd.f32 %v318, %v418
    %v448 = vadd.f32 %v319, %v418
    %v449 = vadd.f32 %v320, %v418
    %v450 = vadd.f32 %v321, %v418
    %v451 = vadd.f32 %v322, %v418
    %v452 = vadd.f32 %v323, %v418
    %v453 = vadd.f32 %v324, %v418
    %v454 = vadd.f32 %v325, %v418
    %v455 = vadd.f32 %v326, %v418
    %v456 = vadd.f32 %v327, %v418
    %v457 = vadd.f32 %v328, %v418
    %v458 = vadd.f32 %v329, %v418
    %v459 = vadd.f32 %v330, %v418
    %v460 = vadd.f32 %v331, %v418
    %v461 = vadd.f32 %v332, %v418
    %v462 = vadd.f32 %v333, %v418
    %v463 = vadd.f32 %v334, %v418
    %v464 = vadd.f32 %v335, %v418
    %v465 = vadd.f32 %v336, %v418
    %v466 = vadd.f32 %v337, %v418
    %v467 = vadd.f32 %v338, %v418
    %v468 = vadd.f32 %v339, %v418
    %v469 = vadd.f32 %v340, %v418
    %v470 = vadd.f32 %v341, %v418
    %v471 = vadd.f32 %v342, %v418
    %v472 = vadd.f32 %v343, %v418
    %v473 = vadd.f32 %v344, %v418
    %v474 = vadd.f32 %v345, %v418
    %v475 = vadd.f32 %v346, %v418
    %v476 = vadd.f32 %v347, %v418
    %v477 = vadd.f32 %v348, %v418
    %v478 = vadd.f32 %v349, %v418
    %v479 = vadd.f32 %v350, %v418
    %v480 = vadd.f32 %v351, %v418
    %v481 = vadd.f32 %v352, %v418
    %v482 = vadd.f32 %v353, %v418
    %v483 = vadd.f32 %v354, %v418
    %v484 = vadd.f32 %v355, %v418
    %v485 = vadd.f32 %v356, %v418
    %v486 = vadd.f32 %v357, %v418
    %v487 = vadd.f32 %v358, %v418
    %v488 = vadd.f32 %v359, %v418
    %v489 = vadd.f32 %v360, %v418
    %v490 = vadd.f32 %v361, %v418
    %v491 = vadd.f32 %v362, %v418
    %v492 = vadd.f32 %v363, %v418
    %v493 = vadd.f32 %v364, %v418
    %v494 = vadd.f32 %v365, %v418
    %v495 = vadd.f32 %v366, %v418
    %v496 = vadd.f32 %v367, %v418
    %v497 = vadd.f32 %v368, %v418
    %v498 = vadd.f32 %v369, %v418
    %v499 = vadd.f32 %v370, %v418
    %v500 = vadd.f32 %v371, %v418
    %v501 = vadd.f32 %v372, %v418
    %v502 = vadd.f32 %v373, %v418
    %v503 = vadd.f32 %v374, %v418
    %v504 = vadd.f32 %v375, %v418
    %v505 = vadd.f32 %v376, %v418
    %v506 = vadd.f32 %v377, %v418
    %v507 = vadd.f32 %v378, %v418
    %v508 = vadd.f32 %v379, %v418
    %v509 = vadd.f32 %v380, %v418
    %v510 = vadd.f32 %v381, %v418
    %v511 = vadd.f32 %v382, %v418
    %v512 = vadd.f32 %v383, %v418
    %v513 = vadd.f32 %v384, %v418
    %v514 = vadd.f32 %v385, %v418
    %v515 = vadd.f32 %v386, %v418
    %v516 = vadd.f32 %v387, %v418
    %v517 = vadd.f32 %v388, %v418
    %v518 = vadd.f32 %v389, %v418
    %v519 = vadd.f32 %v390, %v418
    %v520 = vadd.f32 %v391, %v418
    %v521 = vadd.f32 %v392, %v418
    %v522 = vadd.f32 %v393, %v418
    %v523 = vadd.f32 %v394, %v418
    %v524 = vadd.f32 %v395, %v418
    %v525 = vadd.f32 %v396, %v418
    %v526 = vadd.f32 %v397, %v418
    %v527 = vadd.f32 %v398, %v418
    %v528 = vadd.f32 %v399, %v418
    %v529 = vadd.f32 %v400, %v418
    %v530 = vadd.f32 %v401, %v418
    %v531 = vadd.f32 %v402, %v418
    %v532 = vadd.f32 %v403, %v418
    %v533 = vadd.f32 %v404, %v418
    %v534 = vadd.f32 %v405, %v418
    %v535 = vadd.f32 %v406, %v418
    %v536 = vadd.f32 %v407, %v418
    %v537 = vadd.f32 %v408, %v418
    %v538 = vadd.f32 %v409, %v418
    %v539 = vadd.f32 %v410, %v418
    %v540 = vadd.f32 %v411, %v418
    %v541 = vadd.f32 %v412, %v418
    %v542 = vadd.f32 %v413, %v418
    %v543 = vadd.f32 %v414, %v418
    %v544 = vadd.f32 %v415, %v418
    %v545 = vadd.f32 %v416, %v418
    %v546 = vadd.f32 %v417, %v418
    %547 = vst [vmem:[#allocation7] sm:$0xff] %v419
    %548 = vst [vmem:[#allocation7 + $0x8] sm:$0xff] %v420
    %549 = vst [vmem:[#allocation7 + $0x10] sm:$0xff] %v421
    %550 = vst [vmem:[#allocation7 + $0x18] sm:$0xff] %v422
    %551 = vst [vmem:[#allocation7 + $0x20] sm:$0xff] %v423
    %552 = vst [vmem:[#allocation7 + $0x28] sm:$0xff] %v424
    %553 = vst [vmem:[#allocation7 + $0x30] sm:$0xff] %v425
    %554 = vst [vmem:[#allocation7 + $0x38] sm:$0xff] %v426
    %555 = vst [vmem:[#allocation7 + $0x40] sm:$0xff] %v427
    %556 = vst [vmem:[#allocation7 + $0x48] sm:$0xff] %v428
    %557 = vst [vmem:[#allocation7 + $0x50] sm:$0xff] %v429
    %558 = vst [vmem:[#allocation7 + $0x58] sm:$0xff] %v430
    %559 = vst [vmem:[#allocation7 + $0x60] sm:$0xff] %v431
    %560 = vst [vmem:[#allocation7 + $0x68] sm:$0xff] %v432
    %561 = vst [vmem:[#allocation7 + $0x70] sm:$0xff] %v433
    %562 = vst [vmem:[#allocation7 + $0x78] sm:$0xff] %v434
    %563 = vst [vmem:[#allocation7 + $0x80] sm:$0xff] %v435
    %564 = vst [vmem:[#allocation7 + $0x88] sm:$0xff] %v436
    %565 = vst [vmem:[#allocation7 + $0x90] sm:$0xff] %v437
    %566 = vst [vmem:[#allocation7 + $0x98] sm:$0xff] %v438
    %567 = vst [vmem:[#allocation7 + $0xa0] sm:$0xff] %v439
    %568 = vst [vmem:[#allocation7 + $0xa8] sm:$0xff] %v440
    %569 = vst [vmem:[#allocation7 + $0xb0] sm:$0xff] %v441
    %570 = vst [vmem:[#allocation7 + $0xb8] sm:$0xff] %v442
    %571 = vst [vmem:[#allocation7 + $0xc0] sm:$0xff] %v443
    %572 = vst [vmem:[#allocation7 + $0xc8] sm:$0xff] %v444
    %573 = vst [vmem:[#allocation7 + $0xd0] sm:$0xff] %v445
    %574 = vst [vmem:[#allocation7 + $0xd8] sm:$0xff] %v446
    %575 = vst [vmem:[#allocation7 + $0xe0] sm:$0xff] %v447
    %576 = vst [vmem:[#allocation7 + $0xe8] sm:$0xff] %v448
    %577 = vst [vmem:[#allocation7 + $0xf0] sm:$0xff] %v449
    %578 = vst [vmem:[#allocation7 + $0xf8] sm:$0xff] %v450
    %579 = vst [vmem:[#allocation7 + $0x100] sm:$0xff] %v451
    %580 = vst [vmem:[#allocation7 + $0x108] sm:$0xff] %v452
    %581 = vst [vmem:[#allocation7 + $0x110] sm:$0xff] %v453
    %582 = vst [vmem:[#allocation7 + $0x118] sm:$0xff] %v454
    %583 = vst [vmem:[#allocation7 + $0x120] sm:$0xff] %v455
    %584 = vst [vmem:[#allocation7 + $0x128] sm:$0xff] %v456
    %585 = vst [vmem:[#allocation7 + $0x130] sm:$0xff] %v457
    %586 = vst [vmem:[#allocation7 + $0x138] sm:$0xff] %v458
    %587 = vst [vmem:[#allocation7 + $0x140] sm:$0xff] %v459
    %588 = vst [vmem:[#allocation7 + $0x148] sm:$0xff] %v460
    %589 = vst [vmem:[#allocation7 + $0x150] sm:$0xff] %v461
    %590 = vst [vmem:[#allocation7 + $0x158] sm:$0xff] %v462
    %591 = vst [vmem:[#allocation7 + $0x160] sm:$0xff] %v463
    %592 = vst [vmem:[#allocation7 + $0x168] sm:$0xff] %v464
    %593 = vst [vmem:[#allocation7 + $0x170] sm:$0xff] %v465
    %594 = vst [vmem:[#allocation7 + $0x178] sm:$0xff] %v466
    %595 = vst [vmem:[#allocation7 + $0x180] sm:$0xff] %v467
    %596 = vst [vmem:[#allocation7 + $0x188] sm:$0xff] %v468
    %597 = vst [vmem:[#allocation7 + $0x190] sm:$0xff] %v469
    %598 = vst [vmem:[#allocation7 + $0x198] sm:$0xff] %v470
    %599 = vst [vmem:[#allocation7 + $0x1a0] sm:$0xff] %v471
    %600 = vst [vmem:[#allocation7 + $0x1a8] sm:$0xff] %v472
    %601 = vst [vmem:[#allocation7 + $0x1b0] sm:$0xff] %v473
    %602 = vst [vmem:[#allocation7 + $0x1b8] sm:$0xff] %v474
    %603 = vst [vmem:[#allocation7 + $0x1c0] sm:$0xff] %v475
    %604 = vst [vmem:[#allocation7 + $0x1c8] sm:$0xff] %v476
    %605 = vst [vmem:[#allocation7 + $0x1d0] sm:$0xff] %v477
    %606 = vst [vmem:[#allocation7 + $0x1d8] sm:$0xff] %v478
    %607 = vst [vmem:[#allocation7 + $0x1e0] sm:$0xff] %v479
    %608 = vst [vmem:[#allocation7 + $0x1e8] sm:$0xff] %v480
    %609 = vst [vmem:[#allocation7 + $0x1f0] sm:$0xff] %v481
    %610 = vst [vmem:[#allocation7 + $0x1f8] sm:$0xff] %v482
    %611 = vst [vmem:[#allocation7 + $0x200] sm:$0xff] %v483
    %612 = vst [vmem:[#allocation7 + $0x208] sm:$0xff] %v484
    %613 = vst [vmem:[#allocation7 + $0x210] sm:$0xff] %v485
    %614 = vst [vmem:[#allocation7 + $0x218] sm:$0xff] %v486
    %615 = vst [vmem:[#allocation7 + $0x220] sm:$0xff] %v487
    %616 = vst [vmem:[#allocation7 + $0x228] sm:$0xff] %v488
    %617 = vst [vmem:[#allocation7 + $0x230] sm:$0xff] %v489
    %618 = vst [vmem:[#allocation7 + $0x238] sm:$0xff] %v490
    %619 = vst [vmem:[#allocation7 + $0x240] sm:$0xff] %v491
    %620 = vst [vmem:[#allocation7 + $0x248] sm:$0xff] %v492
    %621 = vst [vmem:[#allocation7 + $0x250] sm:$0xff] %v493
    %622 = vst [vmem:[#allocation7 + $0x258] sm:$0xff] %v494
    %623 = vst [vmem:[#allocation7 + $0x260] sm:$0xff] %v495
    %624 = vst [vmem:[#allocation7 + $0x268] sm:$0xff] %v496
    %625 = vst [vmem:[#allocation7 + $0x270] sm:$0xff] %v497
    %626 = vst [vmem:[#allocation7 + $0x278] sm:$0xff] %v498
    %627 = vst [vmem:[#allocation7 + $0x280] sm:$0xff] %v499
    %628 = vst [vmem:[#allocation7 + $0x288] sm:$0xff] %v500
    %629 = vst [vmem:[#allocation7 + $0x290] sm:$0xff] %v501
    %630 = vst [vmem:[#allocation7 + $0x298] sm:$0xff] %v502
    %631 = vst [vmem:[#allocation7 + $0x2a0] sm:$0xff] %v503
    %632 = vst [vmem:[#allocation7 + $0x2a8] sm:$0xff] %v504
    %633 = vst [vmem:[#allocation7 + $0x2b0] sm:$0xff] %v505
    %634 = vst [vmem:[#allocation7 + $0x2b8] sm:$0xff] %v506
    %635 = vst [vmem:[#allocation7 + $0x2c0] sm:$0xff] %v507
    %636 = vst [vmem:[#allocation7 + $0x2c8] sm:$0xff] %v508
    %637 = vst [vmem:[#allocation7 + $0x2d0] sm:$0xff] %v509
    %638 = vst [vmem:[#allocation7 + $0x2d8] sm:$0xff] %v510
    %639 = vst [vmem:[#allocation7 + $0x2e0] sm:$0xff] %v511
    %640 = vst [vmem:[#allocation7 + $0x2e8] sm:$0xff] %v512
    %641 = vst [vmem:[#allocation7 + $0x2f0] sm:$0xff] %v513
    %642 = vst [vmem:[#allocation7 + $0x2f8] sm:$0xff] %v514
    %643 = vst [vmem:[#allocation7 + $0x300] sm:$0xff] %v515
    %644 = vst [vmem:[#allocation7 + $0x308] sm:$0xff] %v516
    %645 = vst [vmem:[#allocation7 + $0x310] sm:$0xff] %v517
    %646 = vst [vmem:[#allocation7 + $0x318] sm:$0xff] %v518
    %647 = vst [vmem:[#allocation7 + $0x320] sm:$0xff] %v519
    %648 = vst [vmem:[#allocation7 + $0x328] sm:$0xff] %v520
    %649 = vst [vmem:[#allocation7 + $0x330] sm:$0xff] %v521
    %650 = vst [vmem:[#allocation7 + $0x338] sm:$0xff] %v522
    %651 = vst [vmem:[#allocation7 + $0x340] sm:$0xff] %v523
    %652 = vst [vmem:[#allocation7 + $0x348] sm:$0xff] %v524
    %653 = vst [vmem:[#allocation7 + $0x350] sm:$0xff] %v525
    %654 = vst [vmem:[#allocation7 + $0x358] sm:$0xff] %v526
    %655 = vst [vmem:[#allocation7 + $0x360] sm:$0xff] %v527
    %656 = vst [vmem:[#allocation7 + $0x368] sm:$0xff] %v528
    %657 = vst [vmem:[#allocation7 + $0x370] sm:$0xff] %v529
    %658 = vst [vmem:[#allocation7 + $0x378] sm:$0xff] %v530
    %659 = vst [vmem:[#allocation7 + $0x380] sm:$0xff] %v531
    %660 = vst [vmem:[#allocation7 + $0x388] sm:$0xff] %v532
    %661 = vst [vmem:[#allocation7 + $0x390] sm:$0xff] %v533
    %662 = vst [vmem:[#allocation7 + $0x398] sm:$0xff] %v534
    %663 = vst [vmem:[#allocation7 + $0x3a0] sm:$0xff] %v535
    %664 = vst [vmem:[#allocation7 + $0x3a8] sm:$0xff] %v536
    %665 = vst [vmem:[#allocation7 + $0x3b0] sm:$0xff] %v537
    %666 = vst [vmem:[#allocation7 + $0x3b8] sm:$0xff] %v538
    %667 = vst [vmem:[#allocation7 + $0x3c0] sm:$0xff] %v539
    %668 = vst [vmem:[#allocation7 + $0x3c8] sm:$0xff] %v540
    %669 = vst [vmem:[#allocation7 + $0x3d0] sm:$0xff] %v541
    %670 = vst [vmem:[#allocation7 + $0x3d8] sm:$0xff] %v542
    %671 = vst [vmem:[#allocation7 + $0x3e0] sm:$0xff] %v543
    %672 = vst [vmem:[#allocation7 + $0x3e8] sm:$0xff] %v544
    %673 = vst [vmem:[#allocation7 + $0x3f0] sm:$0xff] %v545
    %674 = vst [vmem:[#allocation7 + $0x3f8] sm:$0xff] %v546
    // Predicated region
    $region18: #{tpu_custom_call.1} parent=1 // pred_check
      _
    $region19: #{tpu_custom_call.1} parent=1 // pred_check_branch
      %676 = sbr.rel (0) target = $region21
    $region20: #{tpu_custom_call.1} parent=1 // pred_region
      %s678 = ssub.s32 16384, 16384
      %679 = vsyncadd [#allocation6], %s678
      %s680 = sshll.u32 [#allocation7], 4
      %s681 = int_to_ptr.vmem [resolvable:$true] %s680
      %686 = dma.vmem_to_hbm [thread:$0]  %s681, 16384, %s3, [#allocation6], 4096, 4096, 256
    $region21: #{tpu_custom_call.1} parent=1 // pred_fallthru
      _
    // Predicated region
    $region22: #{tpu_custom_call.1} parent=1 // pred_check
      _
    $region23: #{tpu_custom_call.1} parent=1 // pred_check_branch
      %688 = sbr.rel (0) target = $region25
    $region24: #{tpu_custom_call.1} parent=1 // pred_region
      %689 = dma.done [#allocation6], 16384
    $region25: #{tpu_custom_call.1} parent=1 // pred_fallthru
      _
    %690 = vsyncpa [#allocation5], 1
    %691 = vsyncpa [#allocation6], 1

</llo_original>
